<compile_context>
chip_gen: v7x
topology: tpu7x:2x2x1
jax: 0.10.0
libtpu: 0.0.40
codegen_flags: <defaults>
</compile_context>

<pallas_src>
import functools

import jax
import jax.numpy as jnp
from jax.experimental import pallas as pl
from jax.experimental.pallas import tpu as pltpu


def _round_up(x, m):
    return ((x + m - 1) // m) * m


# ----------------------------- Pallas kernel -------------------------------

def _fused_acc_kernel(x_ref, w1_ref, b1_ref, w2_ref, b2_ref, wh_ref, bh_ref,
                      o_ref, *, num_actions):
    """Fused ConstraintActorCritic forward for one batch tile.

    x:  (TB, obs_dim)
    w1: (obs_dim, HP)   b1: (1, HP)     # [actor | critic | cost] lane-concat,
                                        # HP = round_up(3H, 128) zero-padded
    w2: (HP, HP)        b2: (1, HP)     # block-diagonal per branch
    wh: (HP, A+2)       bh: (1, A+2)    # block-placed heads
    out: (TB, A+3) = [logits (A) | value | cost_value | logsumexp(logits)]
    """
    x = x_ref[...]
    h1 = jnp.tanh(
        jnp.dot(x, w1_ref[...], preferred_element_type=jnp.float32) + b1_ref[...]
    )
    h2 = jnp.tanh(
        jnp.dot(h1, w2_ref[...], preferred_element_type=jnp.float32) + b2_ref[...]
    )
    raw = (
        jnp.dot(h2, wh_ref[...], preferred_element_type=jnp.float32) + bh_ref[...]
    )  # (TB, A+2): cols [0,A) logits, col A value, col A+1 cost value

    # In-kernel masked log-sum-exp over the logit columns only (EUP work).
    col = jax.lax.broadcasted_iota(jnp.int32, raw.shape, 1)
    is_logit = col < num_actions
    neg_big = jnp.float32(-1e30)
    masked = jnp.where(is_logit, raw, neg_big)
    m = jnp.max(masked, axis=-1, keepdims=True)
    lse = jnp.log(jnp.sum(jnp.exp(masked - m), axis=-1, keepdims=True)) + m

    o_ref[...] = jnp.concatenate([raw, lse], axis=-1).astype(o_ref.dtype)


def _pick_batch_tile(batch):
    """Single block for small batches; 128/256/512-row tiles for rollout-sized
    batches (gives BlockSpec double-buffering + megacore sharding)."""
    for cand in (512, 256, 128):
        if batch >= 2 * cand and batch % cand == 0:
            return cand
    return batch


def fused_forward(obs, fp, num_actions):
    """Single pallas_call for the whole 3-branch actor/critic/cost model."""
    batch, obs_dim = obs.shape
    head_w = fp["wh"].shape[1]          # num_actions + 2
    out_w = head_w + 1                  # + logsumexp column
    hp = fp["w1"].shape[1]              # lane-padded fused hidden width
    tb = _pick_batch_tile(batch)
    grid = (batch // tb,)

    def full_spec(arr):
        # Block == full array; same block index every grid step, so the
        # pipeline keeps the weights resident in VMEM.
        return pl.BlockSpec(arr.shape, lambda i: (0, 0))

    kernel = functools.partial(_fused_acc_kernel, num_actions=num_actions)
    return pl.pallas_call(
        kernel,
        out_shape=jax.ShapeDtypeStruct((batch, out_w), jnp.float32),
        grid=grid,
        in_specs=[
            pl.BlockSpec((tb, obs_dim), lambda i: (i, 0)),
            full_spec(fp["w1"]), full_spec(fp["b1"]),
            full_spec(fp["w2"]), full_spec(fp["b2"]),
            full_spec(fp["wh"]), full_spec(fp["bh"]),
        ],
        out_specs=pl.BlockSpec((tb, out_w), lambda i: (i, 0)),
        compiler_params=pltpu.CompilerParams(
            dimension_semantics=("parallel",)),
    )(obs, fp["w1"], fp["b1"], fp["w2"], fp["b2"], fp["wh"], fp["bh"])


# --------------------------- Parameter construction ------------------------

def _init_linear(key, in_dim, out_dim, gain=1.0):
    kw, _ = jax.random.split(key)
    w = gain * jax.random.normal(kw, (in_dim, out_dim), dtype=jnp.float32) / jnp.sqrt(
        jnp.float32(in_dim)
    )
    b = jnp.zeros((1, out_dim), dtype=jnp.float32)  # bias.fill_(0) as in initialize_weights
    return w, b


def make_params(key, obs_dim, hidden, num_actions):
    """Three independent branches (actor / critic / cost_critic), each with its
    own encoder and output head — matching ConstraintActorCritic.__init__."""
    keys = jax.random.split(key, 9)
    head_dims = {"actor": num_actions, "critic": 1, "cost_critic": 1}
    params = {}
    for i, name in enumerate(("actor", "critic", "cost_critic")):
        w1, b1 = _init_linear(keys[3 * i + 0], obs_dim, hidden)
        w2, b2 = _init_linear(keys[3 * i + 1], hidden, hidden)
        wh, bh = _init_linear(keys[3 * i + 2], hidden, head_dims[name])
        params[name] = dict(w1=w1, b1=b1, w2=w2, b2=b2, wh=wh, bh=bh)
    return params


def fuse_params(params, hidden, num_actions):
    """Build the lane-concatenated / block-diagonal / lane-padded weights
    consumed by the fused kernel. Done once, outside the hot path.

    The fused hidden width is padded from 3H to HP = round_up(3H, 128); the
    padding is exact (zero weight rows/cols, zero bias) and keeps every
    activation lane-dense.
    """
    names = ("actor", "critic", "cost_critic")
    H, A = hidden, num_actions
    HP = _round_up(3 * H, 128)
    obs_dim = params["actor"]["w1"].shape[0]
    head_w = A + 2

    w1 = jnp.zeros((obs_dim, HP), dtype=jnp.float32)
    b1 = jnp.zeros((1, HP), dtype=jnp.float32)
    w2 = jnp.zeros((HP, HP), dtype=jnp.float32)
    b2 = jnp.zeros((1, HP), dtype=jnp.float32)
    wh = jnp.zeros((HP, head_w), dtype=jnp.float32)
    bh = jnp.zeros((1, head_w), dtype=jnp.float32)

    for i, n in enumerate(names):
        lo, hi = i * H, (i + 1) * H
        w1 = w1.at[:, lo:hi].set(params[n]["w1"])
        b1 = b1.at[:, lo:hi].set(params[n]["b1"])
        w2 = w2.at[lo:hi, lo:hi].set(params[n]["w2"])
        b2 = b2.at[:, lo:hi].set(params[n]["b2"])

    wh = wh.at[0:H, 0:A].set(params["actor"]["wh"])
    wh = wh.at[H:2 * H, A:A + 1].set(params["critic"]["wh"])
    wh = wh.at[2 * H:3 * H, A + 1:A + 2].set(params["cost_critic"]["wh"])
    bh = bh.at[:, 0:A].set(params["actor"]["bh"])
    bh = bh.at[:, A:A + 1].set(params["critic"]["bh"])
    bh = bh.at[:, A + 1:A + 2].set(params["cost_critic"]["bh"])
    return dict(w1=w1, b1=b1, w2=w2, b2=b2, wh=wh, bh=bh)


# ------------------------------ Forward pass --------------------------------

@functools.partial(jax.jit, static_argnames=("num_actions", "values_only"))
def constraint_actor_critic_forward(fused_params, obs, rnn_states, sample_key,
                                    num_actions, values_only=False):
    """Mirrors ConstraintActorCritic.forward(normalized_obs_dict, rnn_states)."""
    num_cores = 3
    A = num_actions

    # One fused kernel: encoders + identity decoders + all output heads +
    # log-sum-exp of the logits. (In values_only mode the actor columns are
    # computed anyway; the extra FLOPs are negligible and the result dict
    # excludes them.)
    out = fused_forward(obs, fused_params, A)   # (B, A+3)

    values = out[:, A]
    cost_values = out[:, A + 1]

    # forward_core: identity core; rnn_states chunked per branch and passed
    # through unchanged (cheap in-jit slices, no extra kernel launches).
    new_rnn_states = list(jnp.split(rnn_states, num_cores, axis=1))

    result = dict(values=values, cost_values=cost_values,
                  new_rnn_states=new_rnn_states)
    if values_only:
        return result

    action_logits = out[:, :A]
    lse = out[:, A + 2]                          # logsumexp(logits) per row

    # _maybe_sample_actions: categorical sample + log-prob of chosen action.
    actions = jax.random.categorical(sample_key, action_logits, axis=-1)
    taken_logit = jnp.take_along_axis(
        action_logits, actions[:, None], axis=-1).squeeze(-1)
    log_prob_actions = taken_logit - lse

    result["action_logits"] = action_logits
    result["actions"] = actions
    result["log_prob_actions"] = log_prob_actions
    return result


# ---------------------------------- main ------------------------------------

if __name__ == "__main__":
    BATCH = 8
    OBS_DIM = 16
    HIDDEN = 32
    NUM_ACTIONS = 6

    root = jax.random.PRNGKey(0)
    k_params, k_obs, k_rnn, k_sample = jax.random.split(root, 4)

    params = make_params(k_params, OBS_DIM, HIDDEN, NUM_ACTIONS)
    fused = fuse_params(params, HIDDEN, NUM_ACTIONS)

    obs = jax.random.normal(k_obs, (BATCH, OBS_DIM), dtype=jnp.float32)
    # rnn_states: one chunk per core (actor / critic / cost_critic)
    rnn_states = jax.random.normal(k_rnn, (BATCH, 3 * HIDDEN), dtype=jnp.float32)

    result = constraint_actor_critic_forward(
        fused, obs, rnn_states, k_sample, num_actions=NUM_ACTIONS)
    result = jax.block_until_ready(result)

    # ---- shape checks ----
    assert result["values"].shape == (BATCH,)
    assert result["cost_values"].shape == (BATCH,)
    assert result["action_logits"].shape == (BATCH, NUM_ACTIONS)
    assert result["actions"].shape == (BATCH,)
    assert result["log_prob_actions"].shape == (BATCH,)
    assert len(result["new_rnn_states"]) == 3
    assert all(s.shape == (BATCH, HIDDEN) for s in result["new_rnn_states"])

    # ---- numerical check against a plain-JAX per-branch reference ----
    def enc(p, x):
        h1 = jnp.tanh(x @ p["w1"] + p["b1"])
        return jnp.tanh(h1 @ p["w2"] + p["b2"])

    ref_values = (enc(params["critic"], obs) @ params["critic"]["wh"]
                  + params["critic"]["bh"]).squeeze(-1)
    ref_cost = (enc(params["cost_critic"], obs) @ params["cost_critic"]["wh"]
                + params["cost_critic"]["bh"]).squeeze(-1)
    ref_logits = (enc(params["actor"], obs) @ params["actor"]["wh"]
                  + params["actor"]["bh"])
    ref_log_probs = jax.nn.log_softmax(ref_logits, axis=-1)

    assert jnp.allclose(result["values"], ref_values, atol=5e-3, rtol=5e-3)
    assert jnp.allclose(result["cost_values"], ref_cost, atol=5e-3, rtol=5e-3)
    assert jnp.allclose(result["action_logits"], ref_logits, atol=5e-3, rtol=5e-3)
    ref_lp_act = jnp.take_along_axis(
        ref_log_probs, result["actions"][:, None], axis=-1).squeeze(-1)
    assert jnp.allclose(result["log_prob_actions"], ref_lp_act, atol=5e-3, rtol=5e-3)
    assert all(jnp.array_equal(result["new_rnn_states"][i],
                               rnn_states[:, i * HIDDEN:(i + 1) * HIDDEN])
               for i in range(3))

    # values_only path (ConstraintActorCritic.forward(values_only=True))
    vo = jax.block_until_ready(constraint_actor_critic_forward(
        fused, obs, rnn_states, k_sample, num_actions=NUM_ACTIONS,
        values_only=True))
    assert jnp.allclose(vo["values"], ref_values, atol=5e-3, rtol=5e-3)
    assert jnp.allclose(vo["cost_values"], ref_cost, atol=5e-3, rtol=5e-3)
    assert "action_logits" not in vo

    # TODO(synk): obs/returns normalizers (RunningMeanStdInPlace) and RNN cores
    # are not modeled (identity core / pre-normalized obs assumed).

    print("KERNEL_OK")
</pallas_src>

<mosaic_0001>
module attributes {stable_mosaic.version = 11 : i64} {
  func.func @_fused_acc_kernel(%arg0: i32, %arg1: memref<8x16xf32, #tpu.memory_space<vmem>>, %arg2: memref<16x128xf32, #tpu.memory_space<vmem>>, %arg3: memref<1x128xf32, #tpu.memory_space<vmem>>, %arg4: memref<128x128xf32, #tpu.memory_space<vmem>>, %arg5: memref<1x128xf32, #tpu.memory_space<vmem>>, %arg6: memref<128x8xf32, #tpu.memory_space<vmem>>, %arg7: memref<1x8xf32, #tpu.memory_space<vmem>>, %arg8: memref<8x9xf32, #tpu.memory_space<vmem>>) attributes {dimension_semantics = [#tpu.dimension_semantics<parallel>], iteration_bounds = array<i64: 1>, scalar_prefetch = 0 : i64, scratch_operands = 0 : i64, tpu.core_type = #tpu.core_type<tc>, window_params = [{transform_indices = @transform_0, window_bounds = array<i64: 8, 16>}, {pipeline_mode = #tpu.pipeline_mode<synchronous>, transform_indices = @transform_1, window_bounds = array<i64: 16, 128>}, {pipeline_mode = #tpu.pipeline_mode<synchronous>, transform_indices = @transform_2, window_bounds = array<i64: 1, 128>}, {pipeline_mode = #tpu.pipeline_mode<synchronous>, transform_indices = @transform_3, window_bounds = array<i64: 128, 128>}, {pipeline_mode = #tpu.pipeline_mode<synchronous>, transform_indices = @transform_4, window_bounds = array<i64: 1, 128>}, {pipeline_mode = #tpu.pipeline_mode<synchronous>, transform_indices = @transform_5, window_bounds = array<i64: 128, 8>}, {pipeline_mode = #tpu.pipeline_mode<synchronous>, transform_indices = @transform_6, window_bounds = array<i64: 1, 8>}, {transform_indices = @transform_7, window_bounds = array<i64: 8, 9>}]} {
    %c0 = arith.constant 0 : index
    %c0_0 = arith.constant 0 : index
    %0 = vector.load %arg1[%c0, %c0_0] : memref<8x16xf32, #tpu.memory_space<vmem>>, vector<8x16xf32>
    %c0_1 = arith.constant 0 : index
    %c0_2 = arith.constant 0 : index
    %1 = vector.load %arg2[%c0_1, %c0_2] : memref<16x128xf32, #tpu.memory_space<vmem>>, vector<16x128xf32>
    %cst = arith.constant dense<0.000000e+00> : vector<8x128xf32>
    %2 = tpu.matmul %0, %1, %cst {dimension_numbers = #tpu.dot_dimension_numbers<[1], [0], [0], [1], [0, 0, 1, 1], [], []>} : vector<8x16xf32>, vector<16x128xf32>, vector<8x128xf32> -> vector<8x128xf32>
    %c0_3 = arith.constant 0 : index
    %c0_4 = arith.constant 0 : index
    %3 = vector.load %arg3[%c0_3, %c0_4] : memref<1x128xf32, #tpu.memory_space<vmem>>, vector<1x128xf32>
    %4 = vector.broadcast %3 : vector<1x128xf32> to vector<8x128xf32>
    %5 = arith.addf %2, %4 : vector<8x128xf32>
    %6 = math.tanh %5 : vector<8x128xf32>
    %c0_5 = arith.constant 0 : index
    %c0_6 = arith.constant 0 : index
    %7 = vector.load %arg4[%c0_5, %c0_6] : memref<128x128xf32, #tpu.memory_space<vmem>>, vector<128x128xf32>
    %cst_7 = arith.constant dense<0.000000e+00> : vector<8x128xf32>
    %8 = tpu.matmul %6, %7, %cst_7 {dimension_numbers = #tpu.dot_dimension_numbers<[1], [0], [0], [1], [0, 0, 1, 1], [], []>} : vector<8x128xf32>, vector<128x128xf32>, vector<8x128xf32> -> vector<8x128xf32>
    %c0_8 = arith.constant 0 : index
    %c0_9 = arith.constant 0 : index
    %9 = vector.load %arg5[%c0_8, %c0_9] : memref<1x128xf32, #tpu.memory_space<vmem>>, vector<1x128xf32>
    %10 = vector.broadcast %9 : vector<1x128xf32> to vector<8x128xf32>
    %11 = arith.addf %8, %10 : vector<8x128xf32>
    %12 = math.tanh %11 : vector<8x128xf32>
    %c0_10 = arith.constant 0 : index
    %c0_11 = arith.constant 0 : index
    %13 = vector.load %arg6[%c0_10, %c0_11] : memref<128x8xf32, #tpu.memory_space<vmem>>, vector<128x8xf32>
    %cst_12 = arith.constant dense<0.000000e+00> : vector<8x8xf32>
    %14 = tpu.matmul %12, %13, %cst_12 {dimension_numbers = #tpu.dot_dimension_numbers<[1], [0], [0], [1], [0, 0, 1, 1], [], []>} : vector<8x128xf32>, vector<128x8xf32>, vector<8x8xf32> -> vector<8x8xf32>
    %c0_13 = arith.constant 0 : index
    %c0_14 = arith.constant 0 : index
    %15 = vector.load %arg7[%c0_13, %c0_14] : memref<1x8xf32, #tpu.memory_space<vmem>>, vector<1x8xf32>
    %16 = vector.broadcast %15 : vector<1x8xf32> to vector<8x8xf32>
    %17 = arith.addf %14, %16 : vector<8x8xf32>
    %18 = tpu.iota {dimensions = array<i32: 1>} : vector<8x8xi32>
    %c6_i32 = arith.constant 6 : i32
    %19 = vector.broadcast %c6_i32 : i32 to vector<8x8xi32>
    %20 = arith.cmpi slt, %18, %19 : vector<8x8xi32>
    %cst_15 = arith.constant -1.000000e+30 : f32
    %21 = vector.broadcast %cst_15 : f32 to vector<8x8xf32>
    %22 = arith.select %20, %17, %21 : vector<8x8xi1>, vector<8x8xf32>
    %cst_16 = arith.constant dense<0xFF800000> : vector<8xf32>
    %23 = vector.multi_reduction <maximumf>, %22, %cst_16 [1] : vector<8x8xf32> to vector<8xf32>
    %24 = vector.shape_cast %23 : vector<8xf32> to vector<8x1xf32>
    %25 = vector.broadcast %24 : vector<8x1xf32> to vector<8x8xf32>
    %26 = arith.subf %22, %25 : vector<8x8xf32>
    %27 = math.exp %26 : vector<8x8xf32>
    %cst_17 = arith.constant dense<0.000000e+00> : vector<8xf32>
    %28 = vector.multi_reduction <add>, %27, %cst_17 [1] : vector<8x8xf32> to vector<8xf32>
    %29 = vector.shape_cast %28 : vector<8xf32> to vector<8x1xf32>
    %30 = math.log %29 : vector<8x1xf32>
    %31 = arith.addf %30, %24 : vector<8x1xf32>
    %32 = tpu.concatenate %17, %31 in 1 : vector<8x8xf32>, vector<8x1xf32> -> vector<8x9xf32>
    %c0_18 = arith.constant 0 : index
    %c0_19 = arith.constant 0 : index
    %33 = vector.load %arg8[%c0_18, %c0_19] : memref<8x9xf32, #tpu.memory_space<vmem>>, vector<8x9xf32>
    tpu.vector_store %arg8[%c0_18, %c0_19], %32 {strides = array<i32>} : memref<8x9xf32, #tpu.memory_space<vmem>>, vector<8x9xf32>,
    return
  }
  func.func @transform_0(%arg0: i32) -> (i32, i32) {
    %c0_i32 = arith.constant 0 : i32
    %c0_i32_0 = arith.constant 0 : i32
    return %arg0, %c0_i32 : i32, i32
  }
  func.func @transform_1(%arg0: i32) -> (i32, i32) {
    %c0_i32 = arith.constant 0 : i32
    %c0_i32_0 = arith.constant 0 : i32
    %c0_i32_1 = arith.constant 0 : i32
    return %c0_i32, %c0_i32_0 : i32, i32
  }
  func.func @transform_2(%arg0: i32) -> (i32, i32) {
    %c0_i32 = arith.constant 0 : i32
    %c0_i32_0 = arith.constant 0 : i32
    %c0_i32_1 = arith.constant 0 : i32
    return %c0_i32, %c0_i32_0 : i32, i32
  }
  func.func @transform_3(%arg0: i32) -> (i32, i32) {
    %c0_i32 = arith.constant 0 : i32
    %c0_i32_0 = arith.constant 0 : i32
    %c0_i32_1 = arith.constant 0 : i32
    return %c0_i32, %c0_i32_0 : i32, i32
  }
  func.func @transform_4(%arg0: i32) -> (i32, i32) {
    %c0_i32 = arith.constant 0 : i32
    %c0_i32_0 = arith.constant 0 : i32
    %c0_i32_1 = arith.constant 0 : i32
    return %c0_i32, %c0_i32_0 : i32, i32
  }
  func.func @transform_5(%arg0: i32) -> (i32, i32) {
    %c0_i32 = arith.constant 0 : i32
    %c0_i32_0 = arith.constant 0 : i32
    %c0_i32_1 = arith.constant 0 : i32
    return %c0_i32, %c0_i32_0 : i32, i32
  }
  func.func @transform_6(%arg0: i32) -> (i32, i32) {
    %c0_i32 = arith.constant 0 : i32
    %c0_i32_0 = arith.constant 0 : i32
    %c0_i32_1 = arith.constant 0 : i32
    return %c0_i32, %c0_i32_0 : i32, i32
  }
  func.func @transform_7(%arg0: i32) -> (i32, i32) {
    %c0_i32 = arith.constant 0 : i32
    %c0_i32_0 = arith.constant 0 : i32
    return %arg0, %c0_i32 : i32, i32
  }
}

</mosaic_0001>

<llo_original>
// kernel: constraint_actor_critic_forward.1
$region0: #{constraint_actor_critic_forward.1}
  #allocation0 [shape = 'u32[]', space=smem, size = 0x4, offset = 0x4, fixed_abs, tag = 'smem constant byte address 0x4 - core index']
  #allocation1 [shape = 'u32[144,128]{1,0:T(1,128)}', space=vmem, size = 0x12000, scoped, tag = 'internal scratch']
  %s0 = inlined_call_operand.vmem [shape: f32[8,16], index: 0, kind: input, shape index: {}]
  %s1 = inlined_call_operand.vmem [shape: f32[16,128], index: 1, kind: input, shape index: {}]
  %s2 = inlined_call_operand.vmem [shape: f32[1,128], index: 2, kind: input, shape index: {}]
  %s3 = inlined_call_operand.vmem [shape: f32[128,128], index: 3, kind: input, shape index: {}]
  %s4 = inlined_call_operand.vmem [shape: f32[1,128], index: 4, kind: input, shape index: {}]
  %s5 = inlined_call_operand.vmem [shape: f32[128,8], index: 5, kind: input, shape index: {}]
  %s6 = inlined_call_operand.hbm [shape: f32[1,8], index: 6, kind: input, shape index: {}]
  %s7 = inlined_call_operand.vmem [shape: f32[8,9], index: 7, kind: output, shape index: {}]
  %s8 = sld [smem:[#allocation0]]
  $region42: #{constraint_actor_critic_forward.1} parent=0
    _
  %s10 = ssub.s32 1, %s8
  %s11 = scalar_select 0, %s10, %s8
  $region1: #{constraint_actor_critic_forward.1} parent=0
    #allocation2 [shape = 'u8[512]{0}', space=vmem, size = 0x400, scoped, tag = 'input window, operand 6, single buffered']
    #allocation3 [shape = 's32[1]{0}', space=sflag, size = 0x4, scoped, tag = 'scoped memory for constraint_actor_critic_forward.1']
    %12 = vsyncpa [#allocation3], 0
    // Predicated region
    $region2: #{constraint_actor_critic_forward.1} parent=1 // pred_check
      _
    $region3: #{constraint_actor_critic_forward.1} parent=1 // pred_check_branch
      %14 = sbr.rel (0) target = $region5
    $region4: #{constraint_actor_critic_forward.1} parent=1 // pred_region
      _
    $region5: #{constraint_actor_critic_forward.1} parent=1 // pred_fallthru
      _
    // Predicated region
    $region6: #{constraint_actor_critic_forward.1} parent=1 // pred_check
      _
    $region7: #{constraint_actor_critic_forward.1} parent=1 // pred_check_branch
      %16 = sbr.rel (0) target = $region9
    $region8: #{constraint_actor_critic_forward.1} parent=1 // pred_region
      _
    $region9: #{constraint_actor_critic_forward.1} parent=1 // pred_fallthru
      _
    // Predicated region
    $region10: #{constraint_actor_critic_forward.1} parent=1 // pred_check
      _
    $region11: #{constraint_actor_critic_forward.1} parent=1 // pred_check_branch
      %18 = sbr.rel (0) target = $region13
    $region12: #{constraint_actor_critic_forward.1} parent=1 // pred_region
      _
    $region13: #{constraint_actor_critic_forward.1} parent=1 // pred_fallthru
      _
    // Predicated region
    $region14: #{constraint_actor_critic_forward.1} parent=1 // pred_check
      _
    $region15: #{constraint_actor_critic_forward.1} parent=1 // pred_check_branch
      %20 = sbr.rel (0) target = $region17
    $region16: #{constraint_actor_critic_forward.1} parent=1 // pred_region
      _
    $region17: #{constraint_actor_critic_forward.1} parent=1 // pred_fallthru
      _
    // Predicated region
    $region18: #{constraint_actor_critic_forward.1} parent=1 // pred_check
      _
    $region19: #{constraint_actor_critic_forward.1} parent=1 // pred_check_branch
      %22 = sbr.rel (0) target = $region21
    $region20: #{constraint_actor_critic_forward.1} parent=1 // pred_region
      _
    $region21: #{constraint_actor_critic_forward.1} parent=1 // pred_fallthru
      _
    // Predicated region
    $region22: #{constraint_actor_critic_forward.1} parent=1 // pred_check
      _
    $region23: #{constraint_actor_critic_forward.1} parent=1 // pred_check_branch
      %24 = sbr.rel (0) target = $region25
    $region24: #{constraint_actor_critic_forward.1} parent=1 // pred_region
      _
    $region25: #{constraint_actor_critic_forward.1} parent=1 // pred_fallthru
      _
    // Predicated region
    $region26: #{constraint_actor_critic_forward.1} parent=1 // pred_check
      _
    $region27: #{constraint_actor_critic_forward.1} parent=1 // pred_check_branch
      %26 = sbr.rel (0) target = $region29
    $region28: #{constraint_actor_critic_forward.1} parent=1 // pred_region
      %s28 = ssub.s32 16, 16
      %29 = vsyncadd [#allocation3], %s28
      %s31 = sshll.u32 [#allocation2], 4
      %s32 = int_to_ptr.vmem [resolvable:$true] %s31
      %34 = dma.hbm_to_vmem [thread:$0]  %s6, 16, %s32, [#allocation3]
    $region29: #{constraint_actor_critic_forward.1} parent=1 // pred_fallthru
      _
    // Predicated region
    $region30: #{constraint_actor_critic_forward.1} parent=1 // pred_check
      _
    $region31: #{constraint_actor_critic_forward.1} parent=1 // pred_check_branch
      %36 = sbr.rel (0) target = $region33
    $region32: #{constraint_actor_critic_forward.1} parent=1 // pred_region
      %37 = dma.done [#allocation3], 16
    $region33: #{constraint_actor_critic_forward.1} parent=1 // pred_fallthru
      _
    %v38 = vld [vmem:[%s0] sm:$0xff]
    %v39 = vld [vmem:[%s1] sm:$0xff]
    %v40 = vld [vmem:[%s1 + $0x8] sm:$0xff]
    %v41 = vld [vmem:[%s2] sm:$0x1]
    %v43 = vlaneseq
    %v44 = vshrl.u32 %v43, 7
    %v45 = vsub.s32 0, %v44
    %v46 = vrot.slane %v41, %v45
    %vm48 = vcmask 130048
    %v50 = vsel %vm48, %v38, 0
    %52 = vmatprep.subr.mxu0 0.0
    %53 = vmatpush1.msra.mxu0 %v39
    %54 = vmatprep.subr.mxu0 0.0
    %55 = vmatpush1.msra.mxu0 %v40
    %56 = vmatprep.subr.mxu0 0.0
    %57 = vmatpush1.msra.mxu0 0.0
    %58 = vmatprep.subr.mxu0 0.0
    %59 = vmatpush1.msra.mxu0 0.0
    %60 = vmatprep.subr.mxu0 0.0
    %61 = vmatpush1.msra.mxu0 0.0
    %62 = vmatprep.subr.mxu0 0.0
    %63 = vmatpush1.msra.mxu0 0.0
    %64 = vmatprep.subr.mxu0 0.0
    %65 = vmatpush1.msra.mxu0 0.0
    %66 = vmatprep.subr.mxu0 0.0
    %67 = vmatpush1.msra.mxu0 0.0
    %68 = vmatprep.subr.mxu0 0.0
    %69 = vmatpush1.msra.mxu0 0.0
    %70 = vmatprep.subr.mxu0 0.0
    %71 = vmatpush1.msra.mxu0 0.0
    %72 = vmatprep.subr.mxu0 0.0
    %73 = vmatpush1.msra.mxu0 0.0
    %74 = vmatprep.subr.mxu0 0.0
    %75 = vmatpush1.msra.mxu0 0.0
    %76 = vmatprep.subr.mxu0 0.0
    %77 = vmatpush1.msra.mxu0 0.0
    %78 = vmatprep.subr.mxu0 0.0
    %79 = vmatpush1.msra.mxu0 0.0
    %80 = vmatprep.subr.mxu0 0.0
    %81 = vmatpush1.msra.mxu0 0.0
    %82 = vmatprep.subr.mxu0 0.0
    %83 = vmatpush1.msra.mxu0 0.0
    %84 = vmatprep.subr.mxu0 0.0
    %85 = vmatpush1.msra.mxu0 0.0
    %86 = vmatprep.subr.mxu0 0.0
    %87 = vmatpush1.msra.mxu0 0.0
    %88 = vmatprep.subr.mxu0 0.0
    %89 = vmatpush1.msra.mxu0 0.0
    %90 = vmatprep.subr.mxu0 0.0
    %91 = vmatpush1.msra.mxu0 0.0
    %92 = vmatprep.subr.mxu0 0.0
    %93 = vmatpush1.msra.mxu0 0.0
    %94 = vmatprep.subr.mxu0 0.0
    %95 = vmatpush1.msra.mxu0 0.0
    %96 = vmatprep.subr.mxu0 0.0
    %97 = vmatpush1.msra.mxu0 0.0
    %98 = vmatprep.subr.mxu0 0.0
    %99 = vmatpush1.msra.mxu0 0.0
    %100 = vmatprep.subr.mxu0 0.0
    %101 = vmatpush1.msra.mxu0 0.0
    %102 = vmatprep.subr.mxu0 0.0
    %103 = vmatpush1.msra.mxu0 0.0
    %104 = vmatprep.subr.mxu0 0.0
    %105 = vmatpush1.msra.mxu0 0.0
    %106 = vmatprep.subr.mxu0 0.0
    %107 = vmatpush1.msra.mxu0 0.0
    %108 = vmatprep.subr.mxu0 0.0
    %109 = vmatpush1.msra.mxu0 0.0
    %110 = vmatprep.subr.mxu0 0.0
    %111 = vmatpush1.msra.mxu0 0.0
    %112 = vmatprep.subr.mxu0 0.0
    %113 = vmatpush1.msra.mxu0 0.0
    %114 = vmatprep.subr.mxu0 0.0
    %115 = vmatpush1.msra.mxu0 0.0
    %116 = vmatprep.mubr.f32.mxu0 0.0
    %117 = vmatmul.mubr.f32.gmra.mrb[0].mxu0 %v50
    %v118 = vpop.f32.mrb[0].mxu0
    %v119 = vadd.f32 %v46, %v118
    %v120 = vpop.f32.mrb[0].mxu0
    %121 = vdwg.mxu0
    %v122 = vtanh.pop %v119
    %v123 = vld [vmem:[%s3] sm:$0xff]
    %v124 = vld [vmem:[%s3 + $0x8] sm:$0xff]
    %v125 = vld [vmem:[%s3 + $0x10] sm:$0xff]
    %v126 = vld [vmem:[%s3 + $0x18] sm:$0xff]
    %v127 = vld [vmem:[%s3 + $0x20] sm:$0xff]
    %v128 = vld [vmem:[%s3 + $0x28] sm:$0xff]
    %v129 = vld [vmem:[%s3 + $0x30] sm:$0xff]
    %v130 = vld [vmem:[%s3 + $0x38] sm:$0xff]
    %v131 = vld [vmem:[%s3 + $0x40] sm:$0xff]
    %v132 = vld [vmem:[%s3 + $0x48] sm:$0xff]
    %v133 = vld [vmem:[%s3 + $0x50] sm:$0xff]
    %v134 = vld [vmem:[%s3 + $0x58] sm:$0xff]
    %v135 = vld [vmem:[%s3 + $0x60] sm:$0xff]
    %v136 = vld [vmem:[%s3 + $0x68] sm:$0xff]
    %v137 = vld [vmem:[%s3 + $0x70] sm:$0xff]
    %v138 = vld [vmem:[%s3 + $0x78] sm:$0xff]
    %v139 = vld [vmem:[%s4] sm:$0x1]
    %v141 = vlaneseq
    %v142 = vshrl.u32 %v141, 7
    %v143 = vsub.s32 0, %v142
    %v144 = vrot.slane %v139, %v143
    %146 = vmatprep.subr.mxu0 0.0
    %147 = vmatpush1.msra.mxu0 %v123
    %148 = vmatprep.subr.mxu0 0.0
    %149 = vmatpush1.msra.mxu0 %v124
    %150 = vmatprep.subr.mxu0 0.0
    %151 = vmatpush1.msra.mxu0 %v125
    %152 = vmatprep.subr.mxu0 0.0
    %153 = vmatpush1.msra.mxu0 %v126
    %154 = vmatprep.subr.mxu0 0.0
    %155 = vmatpush1.msra.mxu0 %v127
    %156 = vmatprep.subr.mxu0 0.0
    %157 = vmatpush1.msra.mxu0 %v128
    %158 = vmatprep.subr.mxu0 0.0
    %159 = vmatpush1.msra.mxu0 %v129
    %160 = vmatprep.subr.mxu0 0.0
    %161 = vmatpush1.msra.mxu0 %v130
    %162 = vmatprep.subr.mxu0 0.0
    %163 = vmatpush1.msra.mxu0 %v131
    %164 = vmatprep.subr.mxu0 0.0
    %165 = vmatpush1.msra.mxu0 %v132
    %166 = vmatprep.subr.mxu0 0.0
    %167 = vmatpush1.msra.mxu0 %v133
    %168 = vmatprep.subr.mxu0 0.0
    %169 = vmatpush1.msra.mxu0 %v134
    %170 = vmatprep.subr.mxu0 0.0
    %171 = vmatpush1.msra.mxu0 %v135
    %172 = vmatprep.subr.mxu0 0.0
    %173 = vmatpush1.msra.mxu0 %v136
    %174 = vmatprep.subr.mxu0 0.0
    %175 = vmatpush1.msra.mxu0 %v137
    %176 = vmatprep.subr.mxu0 0.0
    %177 = vmatpush1.msra.mxu0 %v138
    %178 = vmatprep.subr.mxu0 0.0
    %179 = vmatpush1.msra.mxu0 0.0
    %180 = vmatprep.subr.mxu0 0.0
    %181 = vmatpush1.msra.mxu0 0.0
    %182 = vmatprep.subr.mxu0 0.0
    %183 = vmatpush1.msra.mxu0 0.0
    %184 = vmatprep.subr.mxu0 0.0
    %185 = vmatpush1.msra.mxu0 0.0
    %186 = vmatprep.subr.mxu0 0.0
    %187 = vmatpush1.msra.mxu0 0.0
    %188 = vmatprep.subr.mxu0 0.0
    %189 = vmatpush1.msra.mxu0 0.0
    %190 = vmatprep.subr.mxu0 0.0
    %191 = vmatpush1.msra.mxu0 0.0
    %192 = vmatprep.subr.mxu0 0.0
    %193 = vmatpush1.msra.mxu0 0.0
    %194 = vmatprep.subr.mxu0 0.0
    %195 = vmatpush1.msra.mxu0 0.0
    %196 = vmatprep.subr.mxu0 0.0
    %197 = vmatpush1.msra.mxu0 0.0
    %198 = vmatprep.subr.mxu0 0.0
    %199 = vmatpush1.msra.mxu0 0.0
    %200 = vmatprep.subr.mxu0 0.0
    %201 = vmatpush1.msra.mxu0 0.0
    %202 = vmatprep.subr.mxu0 0.0
    %203 = vmatpush1.msra.mxu0 0.0
    %204 = vmatprep.subr.mxu0 0.0
    %205 = vmatpush1.msra.mxu0 0.0
    %206 = vmatprep.subr.mxu0 0.0
    %207 = vmatpush1.msra.mxu0 0.0
    %208 = vmatprep.subr.mxu0 0.0
    %209 = vmatpush1.msra.mxu0 0.0
    %210 = vmatprep.mubr.f32.mxu0 0.0
    %211 = vmatmul.mubr.f32.gmra.mrb[0].mxu0 %v122
    %v212 = vpop.f32.mrb[0].mxu0
    %v213 = vadd.f32 %v144, %v212
    %v214 = vpop.f32.mrb[0].mxu0
    %215 = vdwg.mxu0
    %v216 = vtanh.pop %v213
    %v217 = vld [vmem:[%s5] sm:$0xff]
    %v218 = vld [vmem:[%s5 + $0x8] sm:$0xff]
    %v219 = vld [vmem:[%s5 + $0x10] sm:$0xff]
    %v220 = vld [vmem:[%s5 + $0x18] sm:$0xff]
    %v221 = vld [vmem:[%s5 + $0x20] sm:$0xff]
    %v222 = vld [vmem:[%s5 + $0x28] sm:$0xff]
    %v223 = vld [vmem:[%s5 + $0x30] sm:$0xff]
    %v224 = vld [vmem:[%s5 + $0x38] sm:$0xff]
    %v225 = vld [vmem:[%s5 + $0x40] sm:$0xff]
    %v226 = vld [vmem:[%s5 + $0x48] sm:$0xff]
    %v227 = vld [vmem:[%s5 + $0x50] sm:$0xff]
    %v228 = vld [vmem:[%s5 + $0x58] sm:$0xff]
    %v229 = vld [vmem:[%s5 + $0x60] sm:$0xff]
    %v230 = vld [vmem:[%s5 + $0x68] sm:$0xff]
    %v231 = vld [vmem:[%s5 + $0x70] sm:$0xff]
    %v232 = vld [vmem:[%s5 + $0x78] sm:$0xff]
    %v233 = vld [vmem:[#allocation2] sm:$0x1]
    %v235 = vlaneseq
    %v236 = vshrl.u32 %v235, 7
    %v237 = vsub.s32 0, %v236
    %v238 = vrot.slane %v233, %v237
    %240 = vmatprep.subr.mxu0 0.0
    %241 = vmatpush1.msra.mxu0 %v217
    %242 = vmatprep.subr.mxu0 0.0
    %243 = vmatpush1.msra.mxu0 %v218
    %244 = vmatprep.subr.mxu0 0.0
    %245 = vmatpush1.msra.mxu0 %v219
    %246 = vmatprep.subr.mxu0 0.0
    %247 = vmatpush1.msra.mxu0 %v220
    %248 = vmatprep.subr.mxu0 0.0
    %249 = vmatpush1.msra.mxu0 %v221
    %250 = vmatprep.subr.mxu0 0.0
    %251 = vmatpush1.msra.mxu0 %v222
    %252 = vmatprep.subr.mxu0 0.0
    %253 = vmatpush1.msra.mxu0 %v223
    %254 = vmatprep.subr.mxu0 0.0
    %255 = vmatpush1.msra.mxu0 %v224
    %256 = vmatprep.subr.mxu0 0.0
    %257 = vmatpush1.msra.mxu0 %v225
    %258 = vmatprep.subr.mxu0 0.0
    %259 = vmatpush1.msra.mxu0 %v226
    %260 = vmatprep.subr.mxu0 0.0
    %261 = vmatpush1.msra.mxu0 %v227
    %262 = vmatprep.subr.mxu0 0.0
    %263 = vmatpush1.msra.mxu0 %v228
    %264 = vmatprep.subr.mxu0 0.0
    %265 = vmatpush1.msra.mxu0 %v229
    %266 = vmatprep.subr.mxu0 0.0
    %267 = vmatpush1.msra.mxu0 %v230
    %268 = vmatprep.subr.mxu0 0.0
    %269 = vmatpush1.msra.mxu0 %v231
    %270 = vmatprep.subr.mxu0 0.0
    %271 = vmatpush1.msra.mxu0 %v232
    %272 = vmatprep.subr.mxu0 0.0
    %273 = vmatpush1.msra.mxu0 0.0
    %274 = vmatprep.subr.mxu0 0.0
    %275 = vmatpush1.msra.mxu0 0.0
    %276 = vmatprep.subr.mxu0 0.0
    %277 = vmatpush1.msra.mxu0 0.0
    %278 = vmatprep.subr.mxu0 0.0
    %279 = vmatpush1.msra.mxu0 0.0
    %280 = vmatprep.subr.mxu0 0.0
    %281 = vmatpush1.msra.mxu0 0.0
    %282 = vmatprep.subr.mxu0 0.0
    %283 = vmatpush1.msra.mxu0 0.0
    %284 = vmatprep.subr.mxu0 0.0
    %285 = vmatpush1.msra.mxu0 0.0
    %286 = vmatprep.subr.mxu0 0.0
    %287 = vmatpush1.msra.mxu0 0.0
    %288 = vmatprep.subr.mxu0 0.0
    %289 = vmatpush1.msra.mxu0 0.0
    %290 = vmatprep.subr.mxu0 0.0
    %291 = vmatpush1.msra.mxu0 0.0
    %292 = vmatprep.subr.mxu0 0.0
    %293 = vmatpush1.msra.mxu0 0.0
    %294 = vmatprep.subr.mxu0 0.0
    %295 = vmatpush1.msra.mxu0 0.0
    %296 = vmatprep.subr.mxu0 0.0
    %297 = vmatpush1.msra.mxu0 0.0
    %298 = vmatprep.subr.mxu0 0.0
    %299 = vmatpush1.msra.mxu0 0.0
    %300 = vmatprep.subr.mxu0 0.0
    %301 = vmatpush1.msra.mxu0 0.0
    %302 = vmatprep.subr.mxu0 0.0
    %303 = vmatpush1.msra.mxu0 0.0
    %304 = vmatprep.mubr.f32.mxu0 0.0
    %305 = vmatmul.mubr.f32.gmra.mrb[0].mxu0 %v216
    %v306 = vpop.f32.mrb[0].mxu0
    %v307 = vadd.f32 %v238, %v306
    %v308 = vpop.f32.mrb[0].mxu0
    %309 = vdwg.mxu0
    %v310 = vlaneseq
    %v311 = vand.u32 %v310, 127
    %vm312 = vcmp.lt.s32.totalorder %v311, 6
    %v313 = vsel %vm312, %v307, -1e+30
    %vm314 = vcmask 64512
    %v315 = vsel %vm314, %v313, -inf
    %316 = vmax.xlane.f32.xlu0 %v315
    %v317 = vpop.xlane.xlu0 %316
    %v318 = vsub.f32 %v313, %v317
    %v319 = vmul.f32 %v318, 1.442695
    %v320 = vpow.pop %v319
    %v321 = vsel %vm314, %v320, 0.0
    %322 = vadd.xlane.f32.xlu0 %v321
    %v323 = vpop.xlane.xlu0 %322
    %v324 = vlog2.pop %v323
    %v325 = vmul.f32 %v324, 0.6931472
    %v326 = vadd.f32 %v325, %v317
    %v327 = vsel %vm314, %v307, %v326
    %vm328 = vcmask 72704
    %329 = vst.msk [vmem:[%s7] sm:$0xff] %vm328, %v327
    // Predicated region
    $region34: #{constraint_actor_critic_forward.1} parent=1 // pred_check
      _
    $region35: #{constraint_actor_critic_forward.1} parent=1 // pred_check_branch
      %331 = sbr.rel (0) target = $region37
    $region36: #{constraint_actor_critic_forward.1} parent=1 // pred_region
      _
    $region37: #{constraint_actor_critic_forward.1} parent=1 // pred_fallthru
      _
    // Predicated region
    $region38: #{constraint_actor_critic_forward.1} parent=1 // pred_check
      _
    $region39: #{constraint_actor_critic_forward.1} parent=1 // pred_check_branch
      %333 = sbr.rel (0) target = $region41
    $region40: #{constraint_actor_critic_forward.1} parent=1 // pred_region
      _
    $region41: #{constraint_actor_critic_forward.1} parent=1 // pred_fallthru
      _
    %334 = vsyncpa [#allocation3], 1

</llo_original>
